<compile_context>
chip_gen: v7x
topology: tpu7x:2x2x1
jax: 0.10.0
libtpu: 0.0.40
codegen_flags: <defaults>
</compile_context>

<pallas_src>
import functools

import jax
import jax.numpy as jnp
from jax import lax
from jax.experimental import pallas as pl
from jax.experimental.pallas import tpu as pltpu


def _has_bf16_eup():
    """bf16 EUP exists on v6e / v7x; not on v5e and earlier."""
    try:
        kind = jax.devices()[0].device_kind.lower()
    except Exception:
        return False
    return any(tag in kind for tag in ("v6", "v7", "7x"))


def _regrank_kernel(i_ref, j_ref,
                    pred_col_ref, pred_row_ref, tgt_col_ref, tgt_row_ref,
                    loss_out_ref, cnt_out_ref, loss_acc, cnt_acc,
                    *, beta, n, t, nblk, pad, bf16_softplus):
    s = pl.program_id(0)
    i = i_ref[s]                      # row-block of this tile
    j = j_ref[s]                      # col-block of this tile (j >= i)
    last = nblk - 1

    # ---- shared per-tile compute (unconditional, traced once) --------------
    pd = pred_col_ref[...] - pred_row_ref[...]        # (T, T) f32
    td = tgt_col_ref[...] - tgt_row_ref[...]          # (T, T) f32

    # -beta * sign(td) * pd with a single compare+select (td == 0 is masked).
    x = jnp.where(td > 0.0, jnp.float32(-beta), jnp.float32(beta)) * pd

    # Numerically stable softplus: max(x, 0) + log1p(exp(-|x|)).
    neg_abs = -jnp.abs(x)
    if bf16_softplus:
        tail = jnp.log1p(jnp.exp(neg_abs.astype(jnp.bfloat16))).astype(jnp.float32)
    else:
        tail = jnp.log1p(jnp.exp(neg_abs))
    sp = jnp.maximum(x, 0.0) + tail

    base_mask = td != 0.0

    def _fold(mask):
        # Fold whole sublane groups (pure vreg adds, no cross-lane traffic):
        # (T, T) -> (T//8, 8, T) -> sum over axis 0 -> (8, T).
        l = jnp.sum(jnp.where(mask, sp, 0.0).reshape(t // 8, 8, t), axis=0)
        c = jnp.sum(mask.astype(jnp.int32).reshape(t // 8, 8, t), axis=0)
        return l, c

    # ---- diagonal tile: first tile of its row-block -> assign (no init) ----
    @pl.when(j == i)
    def _diag():
        lrow = lax.broadcasted_iota(jnp.int32, (t, t), 0)
        lcol = lax.broadcasted_iota(jnp.int32, (t, t), 1)
        mask = jnp.logical_and(lcol > lrow, base_mask)
        if pad:
            # Padded rows are excluded automatically (col > row >= valid cols).
            mask = jnp.logical_and(mask, lcol < (n - j * t))
        l, c = _fold(mask)
        loss_acc[...] = l
        cnt_acc[...] = c

    # ---- interior tiles: hot path, td != 0 mask only ------------------------
    if pad:
        interior_cond = jnp.logical_and(j > i, j < last)
    else:
        interior_cond = j > i

    @pl.when(interior_cond)
    def _interior():
        l, c = _fold(base_mask)
        loss_acc[...] += l
        cnt_acc[...] += c

    # ---- last-column, off-diagonal tiles: column-padding mask ---------------
    if pad:
        @pl.when(jnp.logical_and(j > i, j == last))
        def _lastcol():
            lcol = lax.broadcasted_iota(jnp.int32, (t, t), 1)
            mask = jnp.logical_and(lcol < (n - j * t), base_mask)
            l, c = _fold(mask)
            loss_acc[...] += l
            cnt_acc[...] += c

    # ---- finalize: one cross-lane reduction per row-block --------------------
    @pl.when(j == last)
    def _finalize():
        loss_out_ref[...] = jnp.full(loss_out_ref.shape,
                                     jnp.sum(loss_acc[...]), jnp.float32)
        cnt_out_ref[...] = jnp.full(cnt_out_ref.shape,
                                    jnp.sum(cnt_acc[...]), jnp.int32)


def reg_rank_loss(pred, target, beta=1.0, tile=512, bf16_softplus=None):
    """JAX/Pallas equivalent of RegRankLoss.forward."""
    # Mirror torch's .squeeze() for the common (N,), (N,1), (1,N) cases.
    pred = jnp.asarray(pred, jnp.float32).reshape(-1)
    target = jnp.asarray(target, jnp.float32).reshape(-1)

    if pred.shape[0] != target.shape[0]:
        # Shape mismatch -> 0 loss (mirrors the PyTorch early return).
        return jnp.float32(0.0)
    n = int(pred.shape[0])
    if n < 2:
        return jnp.float32(0.0)

    if bf16_softplus is None:
        bf16_softplus = _has_bf16_eup()

    # Square, lane-aligned tile (multiple of 128), capped at `tile`.
    tile = max(128, (int(tile) // 128) * 128)
    t = min(tile, ((n + 127) // 128) * 128)
    nblk = (n + t - 1) // t
    n_pad = nblk * t
    pad = (n_pad != n)

    if pad:
        pred_p = jnp.pad(pred, (0, n_pad - n))
        target_p = jnp.pad(target, (0, n_pad - n))
    else:
        pred_p, target_p = pred, target

    pred_col, pred_row = pred_p[:, None], pred_p[None, :]
    tgt_col, tgt_row = target_p[:, None], target_p[None, :]

    # Compacted upper-triangular tile list, row-block-major:
    # (i, j) for i in [0, nblk), j in [i, nblk).  Drives all index_maps via
    # scalar prefetch, so no grid step is ever wasted on a skipped tile.
    ii, jj = [], []
    for a in range(nblk):
        for b in range(a, nblk):
            ii.append(a)
            jj.append(b)
    i_blk = jnp.asarray(ii, dtype=jnp.int32)
    j_blk = jnp.asarray(jj, dtype=jnp.int32)
    ntiles = len(ii)

    kernel = functools.partial(
        _regrank_kernel, beta=float(beta), n=n, t=t, nblk=nblk, pad=pad,
        bf16_softplus=bool(bf16_softplus))

    loss_part, cnt_part = pl.pallas_call(
        kernel,
        out_shape=(
            jax.ShapeDtypeStruct((nblk, 8, 128), jnp.float32),
            jax.ShapeDtypeStruct((nblk, 8, 128), jnp.int32),
        ),
        grid_spec=pltpu.PrefetchScalarGridSpec(
            num_scalar_prefetch=2,
            grid=(ntiles,),
            in_specs=[
                pl.BlockSpec((t, 1), lambda s, ib, jb: (ib[s], 0)),  # pred col
                pl.BlockSpec((1, t), lambda s, ib, jb: (0, jb[s])),  # pred row
                pl.BlockSpec((t, 1), lambda s, ib, jb: (ib[s], 0)),  # tgt col
                pl.BlockSpec((1, t), lambda s, ib, jb: (0, jb[s])),  # tgt row
            ],
            out_specs=(
                pl.BlockSpec((1, 8, 128), lambda s, ib, jb: (ib[s], 0, 0)),
                pl.BlockSpec((1, 8, 128), lambda s, ib, jb: (ib[s], 0, 0)),
            ),
            scratch_shapes=[
                pltpu.VMEM((8, t), jnp.float32),   # sublane-folded loss acc
                pltpu.VMEM((8, t), jnp.int32),     # sublane-folded count acc
            ],
        ),
        compiler_params=pltpu.CompilerParams(
            dimension_semantics=("arbitrary",),
            vmem_limit_bytes=32 * 1024 * 1024,
        ),
    )(i_blk, j_blk, pred_col, pred_row, tgt_col, tgt_row)

    loss_sum = jnp.sum(loss_part[:, 0, 0])
    # Per-row-block count partials are exact int32; sum them in float so the
    # total (~N^2/2) cannot overflow for very large N.  (astype(float64) is a
    # no-op downgrade to f32 when x64 is disabled — still plenty of precision
    # for the mean.)
    c = jnp.sum(cnt_part[:, 0, 0].astype(jnp.float64)).astype(jnp.float32)
    # "if not final_mask.any(): return 0" / divide by num_pairs
    return jnp.where(c > 0.0, loss_sum / jnp.maximum(c, 1.0), jnp.float32(0.0))


def _reference(pred, target, beta=1.0):
    pred = jnp.asarray(pred, jnp.float32).reshape(-1)
    target = jnp.asarray(target, jnp.float32).reshape(-1)
    n = pred.shape[0]
    pd = pred[:, None] - pred[None, :]
    td = target[:, None] - target[None, :]
    triu = jnp.triu(jnp.ones((n, n), bool), k=1)
    mask = triu & (td != 0.0)
    x = -beta * jnp.sign(td) * pd
    loss = jnp.where(mask, jax.nn.softplus(x), 0.0)
    c = jnp.sum(mask)
    return jnp.where(c > 0, jnp.sum(loss) / jnp.maximum(c, 1), 0.0)


if __name__ == "__main__":
    key = jax.random.PRNGKey(0)
    k1, k2, k3, k4 = jax.random.split(key, 4)

    # Case 1: small single-tile case; pred from a regressor head -> (N, 1).
    n1 = 8
    pred1 = jax.random.normal(k1, (n1, 1), jnp.float32)
    target1 = jnp.round(jax.random.uniform(k2, (n1,), jnp.float32) * 3.0)
    out1 = jax.block_until_ready(
        reg_rank_loss(pred1, target1, beta=1.0, bf16_softplus=False))
    ref1 = _reference(pred1, target1, beta=1.0)
    assert jnp.allclose(out1, ref1, atol=1e-5, rtol=1e-5), (out1, ref1)

    # Case 2: multi-block compacted grid with padding (n_pad=384, nblk=3).
    n2 = 300
    pred2 = jax.random.normal(k3, (n2,), jnp.float32)
    target2 = jnp.round(jax.random.uniform(k4, (n2,), jnp.float32) * 5.0)
    out2 = jax.block_until_ready(
        reg_rank_loss(pred2, target2, beta=2.0, tile=128, bf16_softplus=False))
    ref2 = _reference(pred2, target2, beta=2.0)
    assert jnp.allclose(out2, ref2, atol=1e-4, rtol=1e-4), (out2, ref2)

    # Case 3: constant target -> no valid pairs -> loss 0.
    out3 = jax.block_until_ready(
        reg_rank_loss(pred1, jnp.ones((n1,), jnp.float32), beta=1.0,
                      bf16_softplus=False))
    assert jnp.allclose(out3, 0.0), out3

    # Case 4: exact multiple of the tile (no padding path) + auto bf16 tail
    # (enabled on v6e/v7x, off on v5e) -> looser tolerance.
    n4 = 256
    pred4 = jax.random.normal(k1, (n4,), jnp.float32)
    target4 = jnp.round(jax.random.uniform(k2, (n4,), jnp.float32) * 4.0)
    out4 = jax.block_until_ready(
        reg_rank_loss(pred4, target4, beta=1.5, tile=128))
    ref4 = _reference(pred4, target4, beta=1.5)
    assert jnp.allclose(out4, ref4, atol=3e-2, rtol=3e-2), (out4, ref4)

    print("KERNEL_OK")
</pallas_src>

<mosaic_0001>
module attributes {stable_mosaic.version = 11 : i64} {
  func.func @_regrank_kernel(%arg0: i32, %arg1: memref<1xi32, #tpu.memory_space<smem>>, %arg2: memref<1xi32, #tpu.memory_space<smem>>, %arg3: memref<128x1xf32, #tpu.memory_space<vmem>>, %arg4: memref<1x128xf32, #tpu.memory_space<vmem>>, %arg5: memref<128x1xf32, #tpu.memory_space<vmem>>, %arg6: memref<1x128xf32, #tpu.memory_space<vmem>>, %arg7: memref<1x8x128xf32, #tpu.memory_space<vmem>>, %arg8: memref<1x8x128xi32, #tpu.memory_space<vmem>>, %arg9: memref<8x128xf32, #tpu.memory_space<vmem>>, %arg10: memref<8x128xi32, #tpu.memory_space<vmem>>) attributes {dimension_semantics = [#tpu.dimension_semantics<arbitrary>], iteration_bounds = array<i64: 1>, scalar_prefetch = 2 : i64, scratch_operands = 2 : i64, tpu.core_type = #tpu.core_type<tc>, window_params = [{transform_indices = @transform_0, window_bounds = array<i64: 128, 1>}, {transform_indices = @transform_1, window_bounds = array<i64: 1, 128>}, {transform_indices = @transform_2, window_bounds = array<i64: 128, 1>}, {transform_indices = @transform_3, window_bounds = array<i64: 1, 128>}, {transform_indices = @transform_4, window_bounds = array<i64: 1, 8, 128>}, {transform_indices = @transform_5, window_bounds = array<i64: 1, 8, 128>}]} {
    %0 = arith.index_cast %arg0 : i32 to index
    %1 = memref.load %arg1[%0] : memref<1xi32, #tpu.memory_space<smem>>
    %2 = arith.index_cast %arg0 : i32 to index
    %3 = memref.load %arg2[%2] : memref<1xi32, #tpu.memory_space<smem>>
    %c0 = arith.constant 0 : index
    %c0_0 = arith.constant 0 : index
    %4 = vector.load %arg3[%c0, %c0_0] : memref<128x1xf32, #tpu.memory_space<vmem>>, vector<128x1xf32>
    %c0_1 = arith.constant 0 : index
    %c0_2 = arith.constant 0 : index
    %5 = vector.load %arg4[%c0_1, %c0_2] : memref<1x128xf32, #tpu.memory_space<vmem>>, vector<1x128xf32>
    %6 = vector.broadcast %4 : vector<128x1xf32> to vector<128x128xf32>
    %7 = vector.broadcast %5 : vector<1x128xf32> to vector<128x128xf32>
    %8 = arith.subf %6, %7 : vector<128x128xf32>
    %c0_3 = arith.constant 0 : index
    %c0_4 = arith.constant 0 : index
    %9 = vector.load %arg5[%c0_3, %c0_4] : memref<128x1xf32, #tpu.memory_space<vmem>>, vector<128x1xf32>
    %c0_5 = arith.constant 0 : index
    %c0_6 = arith.constant 0 : index
    %10 = vector.load %arg6[%c0_5, %c0_6] : memref<1x128xf32, #tpu.memory_space<vmem>>, vector<1x128xf32>
    %11 = vector.broadcast %9 : vector<128x1xf32> to vector<128x128xf32>
    %12 = vector.broadcast %10 : vector<1x128xf32> to vector<128x128xf32>
    %13 = arith.subf %11, %12 : vector<128x128xf32>
    %cst = arith.constant 0.000000e+00 : f32
    %14 = vector.broadcast %cst : f32 to vector<128x128xf32>
    %15 = arith.cmpf ogt, %13, %14 : vector<128x128xf32>
    %cst_7 = arith.constant -1.000000e+00 : f32
    %cst_8 = arith.constant 1.000000e+00 : f32
    %16 = vector.broadcast %cst_7 : f32 to vector<128x128xf32>
    %17 = vector.broadcast %cst_8 : f32 to vector<128x128xf32>
    %18 = arith.select %15, %16, %17 : vector<128x128xi1>, vector<128x128xf32>
    %19 = arith.mulf %18, %8 : vector<128x128xf32>
    %20 = math.absf %19 : vector<128x128xf32>
    %cst_9 = arith.constant 0.000000e+00 : f32
    %21 = vector.broadcast %cst_9 : f32 to vector<128x128xf32>
    %22 = arith.subf %21, %20 : vector<128x128xf32>
    %23 = math.exp %22 : vector<128x128xf32>
    %24 = math.log1p %23 : vector<128x128xf32>
    %cst_10 = arith.constant 0.000000e+00 : f32
    %25 = vector.broadcast %cst_10 : f32 to vector<128x128xf32>
    %26 = arith.maximumf %19, %25 : vector<128x128xf32>
    %27 = arith.addf %26, %24 : vector<128x128xf32>
    %cst_11 = arith.constant 0.000000e+00 : f32
    %28 = vector.broadcast %cst_11 : f32 to vector<128x128xf32>
    %29 = arith.cmpf one, %13, %28 : vector<128x128xf32>
    %30 = arith.cmpi eq, %3, %1 : i32
    %31 = arith.extui %30 : i1 to i32
    %c0_i32 = arith.constant 0 : i32
    %32 = arith.cmpi ne, %31, %c0_i32 : i32
    scf.if %32 {
      %46 = tpu.iota {dimensions = array<i32: 0>} : vector<128x128xi32>
      %47 = tpu.iota {dimensions = array<i32: 1>} : vector<128x128xi32>
      %48 = arith.cmpi sgt, %47, %46 : vector<128x128xi32>
      %49 = arith.andi %48, %29 : vector<128x128xi1>
      %c128_i32 = arith.constant 128 : i32
      %50 = arith.muli %3, %c128_i32 : i32
      %c8_i32 = arith.constant 8 : i32
      %51 = arith.subi %c8_i32, %50 : i32
      %52 = vector.broadcast %51 : i32 to vector<128x128xi32>
      %53 = arith.cmpi slt, %47, %52 : vector<128x128xi32>
      %54 = arith.andi %49, %53 : vector<128x128xi1>
      %cst_18 = arith.constant 0.000000e+00 : f32
      %55 = vector.broadcast %cst_18 : f32 to vector<128x128xf32>
      %56 = arith.select %54, %27, %55 : vector<128x128xi1>, vector<128x128xf32>
      %57 = vector.shape_cast %56 : vector<128x128xf32> to vector<16x8x128xf32>
      %cst_19 = arith.constant dense<0.000000e+00> : vector<8x128xf32>
      %58 = vector.multi_reduction <add>, %57, %cst_19 [0] : vector<16x8x128xf32> to vector<8x128xf32>
      %59 = arith.extui %54 : vector<128x128xi1> to vector<128x128xi32>
      %60 = vector.shape_cast %59 : vector<128x128xi32> to vector<16x8x128xi32>
      %cst_20 = arith.constant dense<0> : vector<8x128xi32>
      %61 = vector.multi_reduction <add>, %60, %cst_20 [0] : vector<16x8x128xi32> to vector<8x128xi32>
      %c0_21 = arith.constant 0 : index
      %c0_22 = arith.constant 0 : index
      %62 = vector.load %arg9[%c0_21, %c0_22] : memref<8x128xf32, #tpu.memory_space<vmem>>, vector<8x128xf32>
      tpu.vector_store %arg9[%c0_21, %c0_22], %58 {strides = array<i32>} : memref<8x128xf32, #tpu.memory_space<vmem>>, vector<8x128xf32>,
      %c0_23 = arith.constant 0 : index
      %c0_24 = arith.constant 0 : index
      %63 = vector.load %arg10[%c0_23, %c0_24] : memref<8x128xi32, #tpu.memory_space<vmem>>, vector<8x128xi32>
      tpu.vector_store %arg10[%c0_23, %c0_24], %61 {strides = array<i32>} : memref<8x128xi32, #tpu.memory_space<vmem>>, vector<8x128xi32>,
    } else {
    }
    %33 = arith.cmpi sgt, %3, %1 : i32
    %c0_i32_12 = arith.constant 0 : i32
    %34 = arith.cmpi slt, %3, %c0_i32_12 : i32
    %35 = arith.andi %33, %34 : i1
    %36 = arith.extui %35 : i1 to i32
    %c0_i32_13 = arith.constant 0 : i32
    %37 = arith.cmpi ne, %36, %c0_i32_13 : i32
    scf.if %37 {
      %cst_18 = arith.constant 0.000000e+00 : f32
      %46 = vector.broadcast %cst_18 : f32 to vector<128x128xf32>
      %47 = arith.select %29, %27, %46 : vector<128x128xi1>, vector<128x128xf32>
      %48 = vector.shape_cast %47 : vector<128x128xf32> to vector<16x8x128xf32>
      %cst_19 = arith.constant dense<0.000000e+00> : vector<8x128xf32>
      %49 = vector.multi_reduction <add>, %48, %cst_19 [0] : vector<16x8x128xf32> to vector<8x128xf32>
      %50 = arith.extui %29 : vector<128x128xi1> to vector<128x128xi32>
      %51 = vector.shape_cast %50 : vector<128x128xi32> to vector<16x8x128xi32>
      %cst_20 = arith.constant dense<0> : vector<8x128xi32>
      %52 = vector.multi_reduction <add>, %51, %cst_20 [0] : vector<16x8x128xi32> to vector<8x128xi32>
      %c0_21 = arith.constant 0 : index
      %c0_22 = arith.constant 0 : index
      %53 = vector.load %arg9[%c0_21, %c0_22] : memref<8x128xf32, #tpu.memory_space<vmem>>, vector<8x128xf32>
      %54 = arith.addf %53, %49 : vector<8x128xf32>
      %c0_23 = arith.constant 0 : index
      %c0_24 = arith.constant 0 : index
      %55 = vector.load %arg9[%c0_23, %c0_24] : memref<8x128xf32, #tpu.memory_space<vmem>>, vector<8x128xf32>
      tpu.vector_store %arg9[%c0_23, %c0_24], %54 {strides = array<i32>} : memref<8x128xf32, #tpu.memory_space<vmem>>, vector<8x128xf32>,
      %c0_25 = arith.constant 0 : index
      %c0_26 = arith.constant 0 : index
      %56 = vector.load %arg10[%c0_25, %c0_26] : memref<8x128xi32, #tpu.memory_space<vmem>>, vector<8x128xi32>
      %57 = arith.addi %56, %52 : vector<8x128xi32>
      %c0_27 = arith.constant 0 : index
      %c0_28 = arith.constant 0 : index
      %58 = vector.load %arg10[%c0_27, %c0_28] : memref<8x128xi32, #tpu.memory_space<vmem>>, vector<8x128xi32>
      tpu.vector_store %arg10[%c0_27, %c0_28], %57 {strides = array<i32>} : memref<8x128xi32, #tpu.memory_space<vmem>>, vector<8x128xi32>,
    } else {
    }
    %38 = arith.cmpi sgt, %3, %1 : i32
    %c0_i32_14 = arith.constant 0 : i32
    %39 = arith.cmpi eq, %3, %c0_i32_14 : i32
    %40 = arith.andi %38, %39 : i1
    %41 = arith.extui %40 : i1 to i32
    %c0_i32_15 = arith.constant 0 : i32
    %42 = arith.cmpi ne, %41, %c0_i32_15 : i32
    scf.if %42 {
      %46 = tpu.iota {dimensions = array<i32: 1>} : vector<128x128xi32>
      %c128_i32 = arith.constant 128 : i32
      %47 = arith.muli %3, %c128_i32 : i32
      %c8_i32 = arith.constant 8 : i32
      %48 = arith.subi %c8_i32, %47 : i32
      %49 = vector.broadcast %48 : i32 to vector<128x128xi32>
      %50 = arith.cmpi slt, %46, %49 : vector<128x128xi32>
      %51 = arith.andi %50, %29 : vector<128x128xi1>
      %cst_18 = arith.constant 0.000000e+00 : f32
      %52 = vector.broadcast %cst_18 : f32 to vector<128x128xf32>
      %53 = arith.select %51, %27, %52 : vector<128x128xi1>, vector<128x128xf32>
      %54 = vector.shape_cast %53 : vector<128x128xf32> to vector<16x8x128xf32>
      %cst_19 = arith.constant dense<0.000000e+00> : vector<8x128xf32>
      %55 = vector.multi_reduction <add>, %54, %cst_19 [0] : vector<16x8x128xf32> to vector<8x128xf32>
      %56 = arith.extui %51 : vector<128x128xi1> to vector<128x128xi32>
      %57 = vector.shape_cast %56 : vector<128x128xi32> to vector<16x8x128xi32>
      %cst_20 = arith.constant dense<0> : vector<8x128xi32>
      %58 = vector.multi_reduction <add>, %57, %cst_20 [0] : vector<16x8x128xi32> to vector<8x128xi32>
      %c0_21 = arith.constant 0 : index
      %c0_22 = arith.constant 0 : index
      %59 = vector.load %arg9[%c0_21, %c0_22] : memref<8x128xf32, #tpu.memory_space<vmem>>, vector<8x128xf32>
      %60 = arith.addf %59, %55 : vector<8x128xf32>
      %c0_23 = arith.constant 0 : index
      %c0_24 = arith.constant 0 : index
      %61 = vector.load %arg9[%c0_23, %c0_24] : memref<8x128xf32, #tpu.memory_space<vmem>>, vector<8x128xf32>
      tpu.vector_store %arg9[%c0_23, %c0_24], %60 {strides = array<i32>} : memref<8x128xf32, #tpu.memory_space<vmem>>, vector<8x128xf32>,
      %c0_25 = arith.constant 0 : index
      %c0_26 = arith.constant 0 : index
      %62 = vector.load %arg10[%c0_25, %c0_26] : memref<8x128xi32, #tpu.memory_space<vmem>>, vector<8x128xi32>
      %63 = arith.addi %62, %58 : vector<8x128xi32>
      %c0_27 = arith.constant 0 : index
      %c0_28 = arith.constant 0 : index
      %64 = vector.load %arg10[%c0_27, %c0_28] : memref<8x128xi32, #tpu.memory_space<vmem>>, vector<8x128xi32>
      tpu.vector_store %arg10[%c0_27, %c0_28], %63 {strides = array<i32>} : memref<8x128xi32, #tpu.memory_space<vmem>>, vector<8x128xi32>,
    } else {
    }
    %c0_i32_16 = arith.constant 0 : i32
    %43 = arith.cmpi eq, %3, %c0_i32_16 : i32
    %44 = arith.extui %43 : i1 to i32
    %c0_i32_17 = arith.constant 0 : i32
    %45 = arith.cmpi ne, %44, %c0_i32_17 : i32
    scf.if %45 {
      %c0_18 = arith.constant 0 : index
      %c0_19 = arith.constant 0 : index
      %46 = vector.load %arg9[%c0_18, %c0_19] : memref<8x128xf32, #tpu.memory_space<vmem>>, vector<8x128xf32>
      %47 = vector.shape_cast %46 : vector<8x128xf32> to vector<1x8x128xf32>
      %cst_20 = arith.constant dense<0.000000e+00> : vector<1xf32>
      %48 = vector.multi_reduction <add>, %47, %cst_20 [1, 2] : vector<1x8x128xf32> to vector<1xf32>
      %49 = vector.shape_cast %48 : vector<1xf32> to vector<1x1x1xf32>
      %50 = vector.extract %49[0, 0, 0] : f32 from vector<1x1x1xf32>
      %51 = vector.broadcast %50 : f32 to vector<1x8x128xf32>
      %c0_21 = arith.constant 0 : index
      %c0_22 = arith.constant 0 : index
      %c0_23 = arith.constant 0 : index
      %52 = vector.load %arg7[%c0_21, %c0_22, %c0_23] : memref<1x8x128xf32, #tpu.memory_space<vmem>>, vector<1x8x128xf32>
      tpu.vector_store %arg7[%c0_21, %c0_22, %c0_23], %51 {strides = array<i32>} : memref<1x8x128xf32, #tpu.memory_space<vmem>>, vector<1x8x128xf32>,
      %c0_24 = arith.constant 0 : index
      %c0_25 = arith.constant 0 : index
      %53 = vector.load %arg10[%c0_24, %c0_25] : memref<8x128xi32, #tpu.memory_space<vmem>>, vector<8x128xi32>
      %54 = vector.shape_cast %53 : vector<8x128xi32> to vector<1x8x128xi32>
      %cst_26 = arith.constant dense<0> : vector<1xi32>
      %55 = vector.multi_reduction <add>, %54, %cst_26 [1, 2] : vector<1x8x128xi32> to vector<1xi32>
      %56 = vector.shape_cast %55 : vector<1xi32> to vector<1x1x1xi32>
      %57 = vector.extract %56[0, 0, 0] : i32 from vector<1x1x1xi32>
      %58 = vector.broadcast %57 : i32 to vector<1x8x128xi32>
      %c0_27 = arith.constant 0 : index
      %c0_28 = arith.constant 0 : index
      %c0_29 = arith.constant 0 : index
      %59 = vector.load %arg8[%c0_27, %c0_28, %c0_29] : memref<1x8x128xi32, #tpu.memory_space<vmem>>, vector<1x8x128xi32>
      tpu.vector_store %arg8[%c0_27, %c0_28, %c0_29], %58 {strides = array<i32>} : memref<1x8x128xi32, #tpu.memory_space<vmem>>, vector<1x8x128xi32>,
    } else {
    }
    return
  }
  func.func @transform_0(%arg0: i32, %arg1: memref<1xi32, #tpu.memory_space<smem>>, %arg2: memref<1xi32, #tpu.memory_space<smem>>) -> (i32, i32) {
    %0 = arith.index_cast %arg0 : i32 to index
    %1 = memref.load %arg1[%0] : memref<1xi32, #tpu.memory_space<smem>>
    %c0_i32 = arith.constant 0 : i32
    %c0_i32_0 = arith.constant 0 : i32
    return %1, %c0_i32 : i32, i32
  }
  func.func @transform_1(%arg0: i32, %arg1: memref<1xi32, #tpu.memory_space<smem>>, %arg2: memref<1xi32, #tpu.memory_space<smem>>) -> (i32, i32) {
    %0 = arith.index_cast %arg0 : i32 to index
    %1 = memref.load %arg2[%0] : memref<1xi32, #tpu.memory_space<smem>>
    %c0_i32 = arith.constant 0 : i32
    %c0_i32_0 = arith.constant 0 : i32
    return %c0_i32, %1 : i32, i32
  }
  func.func @transform_2(%arg0: i32, %arg1: memref<1xi32, #tpu.memory_space<smem>>, %arg2: memref<1xi32, #tpu.memory_space<smem>>) -> (i32, i32) {
    %0 = arith.index_cast %arg0 : i32 to index
    %1 = memref.load %arg1[%0] : memref<1xi32, #tpu.memory_space<smem>>
    %c0_i32 = arith.constant 0 : i32
    %c0_i32_0 = arith.constant 0 : i32
    return %1, %c0_i32 : i32, i32
  }
  func.func @transform_3(%arg0: i32, %arg1: memref<1xi32, #tpu.memory_space<smem>>, %arg2: memref<1xi32, #tpu.memory_space<smem>>) -> (i32, i32) {
    %0 = arith.index_cast %arg0 : i32 to index
    %1 = memref.load %arg2[%0] : memref<1xi32, #tpu.memory_space<smem>>
    %c0_i32 = arith.constant 0 : i32
    %c0_i32_0 = arith.constant 0 : i32
    return %c0_i32, %1 : i32, i32
  }
  func.func @transform_4(%arg0: i32, %arg1: memref<1xi32, #tpu.memory_space<smem>>, %arg2: memref<1xi32, #tpu.memory_space<smem>>) -> (i32, i32, i32) {
    %0 = arith.index_cast %arg0 : i32 to index
    %1 = memref.load %arg1[%0] : memref<1xi32, #tpu.memory_space<smem>>
    %c0_i32 = arith.constant 0 : i32
    %c0_i32_0 = arith.constant 0 : i32
    %c0_i32_1 = arith.constant 0 : i32
    return %1, %c0_i32, %c0_i32_0 : i32, i32, i32
  }
  func.func @transform_5(%arg0: i32, %arg1: memref<1xi32, #tpu.memory_space<smem>>, %arg2: memref<1xi32, #tpu.memory_space<smem>>) -> (i32, i32, i32) {
    %0 = arith.index_cast %arg0 : i32 to index
    %1 = memref.load %arg1[%0] : memref<1xi32, #tpu.memory_space<smem>>
    %c0_i32 = arith.constant 0 : i32
    %c0_i32_0 = arith.constant 0 : i32
    %c0_i32_1 = arith.constant 0 : i32
    return %1, %c0_i32, %c0_i32_0 : i32, i32, i32
  }
}

</mosaic_0001>

<llo_original>
// kernel: tpu_custom_call.1
$region0: #{tpu_custom_call.1}
  #allocation0 [shape = 'u32[]', space=smem, size = 0x4, offset = 0x4, fixed_abs, tag = 'smem constant byte address 0x4 - core index']
  #allocation1 [shape = 'u32[144,128]{1,0:T(1,128)}', space=vmem, size = 0x12000, scoped, tag = 'internal scratch']
  #allocation2 [shape = 'f32[8,128]{1,0:T(8,128)}', space=vmem, size = 0x1000, scoped, tag = 'scratch operand']
  #allocation3 [shape = 's32[8,128]{1,0:T(8,128)}', space=vmem, size = 0x1000, scoped, tag = 'scratch operand']
  #allocation4 [shape = 's32[1]{0}', space=sflag, size = 0x4, scoped, tag = 'scoped memory for tpu_custom_call.1']
  #allocation5 [shape = 's32[1]{0:T(128)S(6)}', space=smem, size = 0x200, scoped, tag = 'prefetched SMEM operand 0']
  #allocation6 [shape = 's32[1]{0:T(128)S(6)}', space=smem, size = 0x200, scoped, tag = 'prefetched SMEM operand 1']
  %s0 = inlined_call_operand.<no memory space> [shape: s32[1], index: 0, kind: input, shape index: {}]
  %s1 = inlined_call_operand.<no memory space> [shape: s32[1], index: 1, kind: input, shape index: {}]
  %s2 = inlined_call_operand.vmem [shape: f32[128,1], index: 2, kind: input, shape index: {}]
  %s3 = inlined_call_operand.vmem [shape: f32[1,128], index: 3, kind: input, shape index: {}]
  %s4 = inlined_call_operand.vmem [shape: f32[128,1], index: 4, kind: input, shape index: {}]
  %s5 = inlined_call_operand.vmem [shape: f32[1,128], index: 5, kind: input, shape index: {}]
  %s6 = inlined_call_operand.hbm [shape: f32[1,8,128], index: 6, kind: output, shape index: {0}]
  %s7 = inlined_call_operand.hbm [shape: s32[1,8,128], index: 7, kind: output, shape index: {1}]
  %8 = xla_tuple %s6, %s7
  %s9 = sld [smem:[#allocation0]]
  $region50: #{tpu_custom_call.1} parent=0
    _
  %s11 = ssub.s32 1, %s9
  %s12 = scalar_select 0, %s11, %s9
  %13 = sst [smem:[#allocation5]] %s0
  %14 = sst [smem:[#allocation6]] %s1
  $region1: #{tpu_custom_call.1} parent=0
    #allocation7 [shape = 'u8[4096]{0}', space=vmem, size = 0x1000, scoped, tag = 'output window, operand 0, single buffered']
    #allocation8 [shape = 's32[1]{0}', space=sflag, size = 0x4, scoped, tag = 'scoped memory for tpu_custom_call.1']
    #allocation9 [shape = 'u8[4096]{0}', space=vmem, size = 0x1000, scoped, tag = 'output window, operand 1, single buffered']
    #allocation10 [shape = 's32[1]{0}', space=sflag, size = 0x4, scoped, tag = 'scoped memory for tpu_custom_call.1']
    %15 = vsyncpa [#allocation8], 0
    %16 = vsyncpa [#allocation10], 0
    // Predicated region
    $region2: #{tpu_custom_call.1} parent=1 // pred_check
      _
    $region3: #{tpu_custom_call.1} parent=1 // pred_check_branch
      %18 = sbr.rel (0) target = $region5
    $region4: #{tpu_custom_call.1} parent=1 // pred_region
      %s19 = sld [smem:[#allocation5]]
      %s20 = smul.u32 16, %s19
      %p21 = scmp.lt.s32.totalorder %s20, 15
      %s22 = scalar_select %p21, %s20, 15
      %s23 = smul.addr %s22, 8
      %s24 = scalar_lea.vmem %s2, %s23
      %s25 = sld [smem:[#allocation5]]
      %s26 = smul.u32 16, %s25
    $region5: #{tpu_custom_call.1} parent=1 // pred_fallthru
      _
    // Predicated region
    $region6: #{tpu_custom_call.1} parent=1 // pred_check
      _
    $region7: #{tpu_custom_call.1} parent=1 // pred_check_branch
      %28 = sbr.rel (0) target = $region9
    $region8: #{tpu_custom_call.1} parent=1 // pred_region
      %s29 = sld [smem:[#allocation6]]
      %p30 = scmp.lt.s32.totalorder %s29, 0
      %s31 = scalar_select %p30, %s29, 0
      %s32 = scalar_lea.vmem %s3, %s31
      %s33 = sld [smem:[#allocation6]]
    $region9: #{tpu_custom_call.1} parent=1 // pred_fallthru
      _
    // Predicated region
    $region10: #{tpu_custom_call.1} parent=1 // pred_check
      _
    $region11: #{tpu_custom_call.1} parent=1 // pred_check_branch
      %35 = sbr.rel (0) target = $region13
    $region12: #{tpu_custom_call.1} parent=1 // pred_region
      %s36 = sld [smem:[#allocation5]]
      %s37 = smul.u32 16, %s36
      %p38 = scmp.lt.s32.totalorder %s37, 15
      %s39 = scalar_select %p38, %s37, 15
      %s40 = smul.addr %s39, 8
      %s41 = scalar_lea.vmem %s4, %s40
      %s42 = sld [smem:[#allocation5]]
      %s43 = smul.u32 16, %s42
    $region13: #{tpu_custom_call.1} parent=1 // pred_fallthru
      _
    // Predicated region
    $region14: #{tpu_custom_call.1} parent=1 // pred_check
      _
    $region15: #{tpu_custom_call.1} parent=1 // pred_check_branch
      %45 = sbr.rel (0) target = $region17
    $region16: #{tpu_custom_call.1} parent=1 // pred_region
      %s46 = sld [smem:[#allocation6]]
      %p47 = scmp.lt.s32.totalorder %s46, 0
      %s48 = scalar_select %p47, %s46, 0
      %s49 = scalar_lea.vmem %s5, %s48
      %s50 = sld [smem:[#allocation6]]
    $region17: #{tpu_custom_call.1} parent=1 // pred_fallthru
      _
    %s51 = sld [smem:[#allocation5]]
    %s52 = smul.u32 16, %s51
    %p53 = scmp.lt.s32.totalorder %s52, 15
    %s54 = scalar_select %p53, %s52, 15
    %s55 = smul.addr %s54, 8
    %s56 = scalar_lea.vmem %s2, %s55
    %s57 = sld [smem:[#allocation6]]
    %p58 = scmp.lt.s32.totalorder %s57, 0
    %s59 = scalar_select %p58, %s57, 0
    %s60 = scalar_lea.vmem %s3, %s59
    %s61 = sld [smem:[#allocation5]]
    %s62 = smul.u32 16, %s61
    %p63 = scmp.lt.s32.totalorder %s62, 15
    %s64 = scalar_select %p63, %s62, 15
    %s65 = smul.addr %s64, 8
    %s66 = scalar_lea.vmem %s4, %s65
    %s67 = sld [smem:[#allocation6]]
    %p68 = scmp.lt.s32.totalorder %s67, 0
    %s69 = scalar_select %p68, %s67, 0
    %s70 = scalar_lea.vmem %s5, %s69
    %s71 = sld [smem:[#allocation5]]
    %s72 = smul.u32 16, %s71
    %p73 = scmp.lt.s32.totalorder %s72, 15
    %s74 = scalar_select %p73, %s72, 15
    %s75 = smul.addr %s74, 8
    %s76 = scalar_lea.vmem %s2, %s75
    %s77 = sld [smem:[#allocation5]]
    %s78 = smul.u32 16, %s77
    %s79 = sld [smem:[#allocation6]]
    %p80 = scmp.lt.s32.totalorder %s79, 0
    %s81 = scalar_select %p80, %s79, 0
    %s82 = scalar_lea.vmem %s3, %s81
    %s83 = sld [smem:[#allocation6]]
    %s84 = sld [smem:[#allocation5]]
    %s85 = smul.u32 16, %s84
    %p86 = scmp.lt.s32.totalorder %s85, 15
    %s87 = scalar_select %p86, %s85, 15
    %s88 = smul.addr %s87, 8
    %s89 = scalar_lea.vmem %s4, %s88
    %s90 = sld [smem:[#allocation5]]
    %s91 = smul.u32 16, %s90
    %s92 = sld [smem:[#allocation6]]
    %p93 = scmp.lt.s32.totalorder %s92, 0
    %s94 = scalar_select %p93, %s92, 0
    %s95 = scalar_lea.vmem %s5, %s94
    %s96 = sld [smem:[#allocation6]]
    %s97 = sld [smem:[#allocation5]]
    %s98 = sld [smem:[#allocation5]]
    %s99 = sld [smem:[#allocation5]]
    %s100 = sld [smem:[#allocation6]]
    %v101 = vld [vmem:[%s76] sm:$0xff]
    %v102 = vld [vmem:[%s76 + $0x8] sm:$0xff]
    %v103 = vld [vmem:[%s76 + $0x10] sm:$0xff]
    %v104 = vld [vmem:[%s76 + $0x18] sm:$0xff]
    %v105 = vld [vmem:[%s76 + $0x20] sm:$0xff]
    %v106 = vld [vmem:[%s76 + $0x28] sm:$0xff]
    %v107 = vld [vmem:[%s76 + $0x30] sm:$0xff]
    %v108 = vld [vmem:[%s76 + $0x38] sm:$0xff]
    %v109 = vld [vmem:[%s76 + $0x40] sm:$0xff]
    %v110 = vld [vmem:[%s76 + $0x48] sm:$0xff]
    %v111 = vld [vmem:[%s76 + $0x50] sm:$0xff]
    %v112 = vld [vmem:[%s76 + $0x58] sm:$0xff]
    %v113 = vld [vmem:[%s76 + $0x60] sm:$0xff]
    %v114 = vld [vmem:[%s76 + $0x68] sm:$0xff]
    %v115 = vld [vmem:[%s76 + $0x70] sm:$0xff]
    %v116 = vld [vmem:[%s76 + $0x78] sm:$0xff]
    %v117 = vld [vmem:[%s82] sm:$0x1]
    %119 = vset.pattern.permute.xlu0 0
    %120 = vperm.xlu0 %119, %v101
    %v121 = vpop.permute.xlu0 %120
    %124 = vset.pattern.permute.xlu0 0
    %125 = vperm.xlu0 %124, %v102
    %v126 = vpop.permute.xlu0 %125
    %129 = vset.pattern.permute.xlu0 0
    %130 = vperm.xlu0 %129, %v103
    %v131 = vpop.permute.xlu0 %130
    %134 = vset.pattern.permute.xlu0 0
    %135 = vperm.xlu0 %134, %v104
    %v136 = vpop.permute.xlu0 %135
    %139 = vset.pattern.permute.xlu0 0
    %140 = vperm.xlu0 %139, %v105
    %v141 = vpop.permute.xlu0 %140
    %144 = vset.pattern.permute.xlu0 0
    %145 = vperm.xlu0 %144, %v106
    %v146 = vpop.permute.xlu0 %145
    %149 = vset.pattern.permute.xlu0 0
    %150 = vperm.xlu0 %149, %v107
    %v151 = vpop.permute.xlu0 %150
    %154 = vset.pattern.permute.xlu0 0
    %155 = vperm.xlu0 %154, %v108
    %v156 = vpop.permute.xlu0 %155
    %159 = vset.pattern.permute.xlu0 0
    %160 = vperm.xlu0 %159, %v109
    %v161 = vpop.permute.xlu0 %160
    %164 = vset.pattern.permute.xlu0 0
    %165 = vperm.xlu0 %164, %v110
    %v166 = vpop.permute.xlu0 %165
    %169 = vset.pattern.permute.xlu0 0
    %170 = vperm.xlu0 %169, %v111
    %v171 = vpop.permute.xlu0 %170
    %174 = vset.pattern.permute.xlu0 0
    %175 = vperm.xlu0 %174, %v112
    %v176 = vpop.permute.xlu0 %175
    %179 = vset.pattern.permute.xlu0 0
    %180 = vperm.xlu0 %179, %v113
    %v181 = vpop.permute.xlu0 %180
    %184 = vset.pattern.permute.xlu0 0
    %185 = vperm.xlu0 %184, %v114
    %v186 = vpop.permute.xlu0 %185
    %189 = vset.pattern.permute.xlu0 0
    %190 = vperm.xlu0 %189, %v115
    %v191 = vpop.permute.xlu0 %190
    %194 = vset.pattern.permute.xlu0 0
    %195 = vperm.xlu0 %194, %v116
    %v196 = vpop.permute.xlu0 %195
    %v199 = vlaneseq
    %v200 = vshrl.u32 %v199, 7
    %v201 = vsub.s32 0, %v200
    %v202 = vrot.slane %v117, %v201
    %v204 = vsub.f32 %v121, %v202
    %v205 = vsub.f32 %v126, %v202
    %v206 = vsub.f32 %v131, %v202
    %v207 = vsub.f32 %v136, %v202
    %v208 = vsub.f32 %v141, %v202
    %v209 = vsub.f32 %v146, %v202
    %v210 = vsub.f32 %v151, %v202
    %v211 = vsub.f32 %v156, %v202
    %v212 = vsub.f32 %v161, %v202
    %v213 = vsub.f32 %v166, %v202
    %v214 = vsub.f32 %v171, %v202
    %v215 = vsub.f32 %v176, %v202
    %v216 = vsub.f32 %v181, %v202
    %v217 = vsub.f32 %v186, %v202
    %v218 = vsub.f32 %v191, %v202
    %v219 = vsub.f32 %v196, %v202
    %v220 = vld [vmem:[%s89] sm:$0xff]
    %v221 = vld [vmem:[%s89 + $0x8] sm:$0xff]
    %v222 = vld [vmem:[%s89 + $0x10] sm:$0xff]
    %v223 = vld [vmem:[%s89 + $0x18] sm:$0xff]
    %v224 = vld [vmem:[%s89 + $0x20] sm:$0xff]
    %v225 = vld [vmem:[%s89 + $0x28] sm:$0xff]
    %v226 = vld [vmem:[%s89 + $0x30] sm:$0xff]
    %v227 = vld [vmem:[%s89 + $0x38] sm:$0xff]
    %v228 = vld [vmem:[%s89 + $0x40] sm:$0xff]
    %v229 = vld [vmem:[%s89 + $0x48] sm:$0xff]
    %v230 = vld [vmem:[%s89 + $0x50] sm:$0xff]
    %v231 = vld [vmem:[%s89 + $0x58] sm:$0xff]
    %v232 = vld [vmem:[%s89 + $0x60] sm:$0xff]
    %v233 = vld [vmem:[%s89 + $0x68] sm:$0xff]
    %v234 = vld [vmem:[%s89 + $0x70] sm:$0xff]
    %v235 = vld [vmem:[%s89 + $0x78] sm:$0xff]
    %v236 = vld [vmem:[%s95] sm:$0x1]
    %238 = vset.pattern.permute.xlu0 0
    %239 = vperm.xlu0 %238, %v220
    %v240 = vpop.permute.xlu0 %239
    %243 = vset.pattern.permute.xlu0 0
    %244 = vperm.xlu0 %243, %v221
    %v245 = vpop.permute.xlu0 %244
    %248 = vset.pattern.permute.xlu0 0
    %249 = vperm.xlu0 %248, %v222
    %v250 = vpop.permute.xlu0 %249
    %253 = vset.pattern.permute.xlu0 0
    %254 = vperm.xlu0 %253, %v223
    %v255 = vpop.permute.xlu0 %254
    %258 = vset.pattern.permute.xlu0 0
    %259 = vperm.xlu0 %258, %v224
    %v260 = vpop.permute.xlu0 %259
    %263 = vset.pattern.permute.xlu0 0
    %264 = vperm.xlu0 %263, %v225
    %v265 = vpop.permute.xlu0 %264
    %268 = vset.pattern.permute.xlu0 0
    %269 = vperm.xlu0 %268, %v226
    %v270 = vpop.permute.xlu0 %269
    %273 = vset.pattern.permute.xlu0 0
    %274 = vperm.xlu0 %273, %v227
    %v275 = vpop.permute.xlu0 %274
    %278 = vset.pattern.permute.xlu0 0
    %279 = vperm.xlu0 %278, %v228
    %v280 = vpop.permute.xlu0 %279
    %283 = vset.pattern.permute.xlu0 0
    %284 = vperm.xlu0 %283, %v229
    %v285 = vpop.permute.xlu0 %284
    %288 = vset.pattern.permute.xlu0 0
    %289 = vperm.xlu0 %288, %v230
    %v290 = vpop.permute.xlu0 %289
    %293 = vset.pattern.permute.xlu0 0
    %294 = vperm.xlu0 %293, %v231
    %v295 = vpop.permute.xlu0 %294
    %298 = vset.pattern.permute.xlu0 0
    %299 = vperm.xlu0 %298, %v232
    %v300 = vpop.permute.xlu0 %299
    %303 = vset.pattern.permute.xlu0 0
    %304 = vperm.xlu0 %303, %v233
    %v305 = vpop.permute.xlu0 %304
    %308 = vset.pattern.permute.xlu0 0
    %309 = vperm.xlu0 %308, %v234
    %v310 = vpop.permute.xlu0 %309
    %313 = vset.pattern.permute.xlu0 0
    %314 = vperm.xlu0 %313, %v235
    %v315 = vpop.permute.xlu0 %314
    %v318 = vlaneseq
    %v319 = vshrl.u32 %v318, 7
    %v320 = vsub.s32 0, %v319
    %v321 = vrot.slane %v236, %v320
    %v323 = vsub.f32 %v240, %v321
    %v324 = vsub.f32 %v245, %v321
    %v325 = vsub.f32 %v250, %v321
    %v326 = vsub.f32 %v255, %v321
    %v327 = vsub.f32 %v260, %v321
    %v328 = vsub.f32 %v265, %v321
    %v329 = vsub.f32 %v270, %v321
    %v330 = vsub.f32 %v275, %v321
    %v331 = vsub.f32 %v280, %v321
    %v332 = vsub.f32 %v285, %v321
    %v333 = vsub.f32 %v290, %v321
    %v334 = vsub.f32 %v295, %v321
    %v335 = vsub.f32 %v300, %v321
    %v336 = vsub.f32 %v305, %v321
    %v337 = vsub.f32 %v310, %v321
    %v338 = vsub.f32 %v315, %v321
    %vm339 = vcmp.gt.f32.partialorder %v323, 0.0
    %vm340 = vcmp.gt.f32.partialorder %v324, 0.0
    %vm341 = vcmp.gt.f32.partialorder %v325, 0.0
    %vm342 = vcmp.gt.f32.partialorder %v326, 0.0
    %vm343 = vcmp.gt.f32.partialorder %v327, 0.0
    %vm344 = vcmp.gt.f32.partialorder %v328, 0.0
    %vm345 = vcmp.gt.f32.partialorder %v329, 0.0
    %vm346 = vcmp.gt.f32.partialorder %v330, 0.0
    %vm347 = vcmp.gt.f32.partialorder %v331, 0.0
    %vm348 = vcmp.gt.f32.partialorder %v332, 0.0
    %vm349 = vcmp.gt.f32.partialorder %v333, 0.0
    %vm350 = vcmp.gt.f32.partialorder %v334, 0.0
    %vm351 = vcmp.gt.f32.partialorder %v335, 0.0
    %vm352 = vcmp.gt.f32.partialorder %v336, 0.0
    %vm353 = vcmp.gt.f32.partialorder %v337, 0.0
    %vm354 = vcmp.gt.f32.partialorder %v338, 0.0
    %v355 = vsel %vm339, -1.0, 1.0
    %v356 = vsel %vm340, -1.0, 1.0
    %v357 = vsel %vm341, -1.0, 1.0
    %v358 = vsel %vm342, -1.0, 1.0
    %v359 = vsel %vm343, -1.0, 1.0
    %v360 = vsel %vm344, -1.0, 1.0
    %v361 = vsel %vm345, -1.0, 1.0
    %v362 = vsel %vm346, -1.0, 1.0
    %v363 = vsel %vm347, -1.0, 1.0
    %v364 = vsel %vm348, -1.0, 1.0
    %v365 = vsel %vm349, -1.0, 1.0
    %v366 = vsel %vm350, -1.0, 1.0
    %v367 = vsel %vm351, -1.0, 1.0
    %v368 = vsel %vm352, -1.0, 1.0
    %v369 = vsel %vm353, -1.0, 1.0
    %v370 = vsel %vm354, -1.0, 1.0
    %v371 = vmul.f32 %v355, %v204
    %v372 = vmul.f32 %v356, %v205
    %v373 = vmul.f32 %v357, %v206
    %v374 = vmul.f32 %v358, %v207
    %v375 = vmul.f32 %v359, %v208
    %v376 = vmul.f32 %v360, %v209
    %v377 = vmul.f32 %v361, %v210
    %v378 = vmul.f32 %v362, %v211
    %v379 = vmul.f32 %v363, %v212
    %v380 = vmul.f32 %v364, %v213
    %v381 = vmul.f32 %v365, %v214
    %v382 = vmul.f32 %v366, %v215
    %v383 = vmul.f32 %v367, %v216
    %v384 = vmul.f32 %v368, %v217
    %v385 = vmul.f32 %v369, %v218
    %v386 = vmul.f32 %v370, %v219
    %v387 = vand.u32 2147483647, %v371
    %v388 = vand.u32 2147483647, %v372
    %v389 = vand.u32 2147483647, %v373
    %v390 = vand.u32 2147483647, %v374
    %v391 = vand.u32 2147483647, %v375
    %v392 = vand.u32 2147483647, %v376
    %v393 = vand.u32 2147483647, %v377
    %v394 = vand.u32 2147483647, %v378
    %v395 = vand.u32 2147483647, %v379
    %v396 = vand.u32 2147483647, %v380
    %v397 = vand.u32 2147483647, %v381
    %v398 = vand.u32 2147483647, %v382
    %v399 = vand.u32 2147483647, %v383
    %v400 = vand.u32 2147483647, %v384
    %v401 = vand.u32 2147483647, %v385
    %v402 = vand.u32 2147483647, %v386
    %v403 = vsub.f32 0.0, %v387
    %v404 = vsub.f32 0.0, %v388
    %v405 = vsub.f32 0.0, %v389
    %v406 = vsub.f32 0.0, %v390
    %v407 = vsub.f32 0.0, %v391
    %v408 = vsub.f32 0.0, %v392
    %v409 = vsub.f32 0.0, %v393
    %v410 = vsub.f32 0.0, %v394
    %v411 = vsub.f32 0.0, %v395
    %v412 = vsub.f32 0.0, %v396
    %v413 = vsub.f32 0.0, %v397
    %v414 = vsub.f32 0.0, %v398
    %v415 = vsub.f32 0.0, %v399
    %v416 = vsub.f32 0.0, %v400
    %v417 = vsub.f32 0.0, %v401
    %v418 = vsub.f32 0.0, %v402
    %v419 = vmul.f32 %v403, 1.442695
    %v420 = vpow.pop %v419
    %v421 = vmul.f32 %v404, 1.442695
    %v422 = vpow.pop %v421
    %v423 = vmul.f32 %v405, 1.442695
    %v424 = vpow.pop %v423
    %v425 = vmul.f32 %v406, 1.442695
    %v426 = vpow.pop %v425
    %v427 = vmul.f32 %v407, 1.442695
    %v428 = vpow.pop %v427
    %v429 = vmul.f32 %v408, 1.442695
    %v430 = vpow.pop %v429
    %v431 = vmul.f32 %v409, 1.442695
    %v432 = vpow.pop %v431
    %v433 = vmul.f32 %v410, 1.442695
    %v434 = vpow.pop %v433
    %v435 = vmul.f32 %v411, 1.442695
    %v436 = vpow.pop %v435
    %v437 = vmul.f32 %v412, 1.442695
    %v438 = vpow.pop %v437
    %v439 = vmul.f32 %v413, 1.442695
    %v440 = vpow.pop %v439
    %v441 = vmul.f32 %v414, 1.442695
    %v442 = vpow.pop %v441
    %v443 = vmul.f32 %v415, 1.442695
    %v444 = vpow.pop %v443
    %v445 = vmul.f32 %v416, 1.442695
    %v446 = vpow.pop %v445
    %v447 = vmul.f32 %v417, 1.442695
    %v448 = vpow.pop %v447
    %v449 = vmul.f32 %v418, 1.442695
    %v450 = vpow.pop %v449
    %v451 = vadd.f32 %v420, 1.0
    %v452 = vlog2.pop %v451
    %v453 = vmul.f32 %v452, 0.6931472
    %v454 = vmul.f32 -0.5, %v420
    %v455 = vadd.f32 %v454, 1.0
    %v456 = vmul.f32 %v455, %v420
    %v457 = vand.u32 2147483647, %v420
    %vm458 = vcmp.lt.f32.partialorder %v457, 0.0004427343
    %v459 = vsel %vm458, %v456, %v453
    %v460 = vadd.f32 %v422, 1.0
    %v461 = vlog2.pop %v460
    %v462 = vmul.f32 %v461, 0.6931472
    %v463 = vmul.f32 -0.5, %v422
    %v464 = vadd.f32 %v463, 1.0
    %v465 = vmul.f32 %v464, %v422
    %v466 = vand.u32 2147483647, %v422
    %vm467 = vcmp.lt.f32.partialorder %v466, 0.0004427343
    %v468 = vsel %vm467, %v465, %v462
    %v469 = vadd.f32 %v424, 1.0
    %v470 = vlog2.pop %v469
    %v471 = vmul.f32 %v470, 0.6931472
    %v472 = vmul.f32 -0.5, %v424
    %v473 = vadd.f32 %v472, 1.0
    %v474 = vmul.f32 %v473, %v424
    %v475 = vand.u32 2147483647, %v424
    %vm476 = vcmp.lt.f32.partialorder %v475, 0.0004427343
    %v477 = vsel %vm476, %v474, %v471
    %v478 = vadd.f32 %v426, 1.0
    %v479 = vlog2.pop %v478
    %v480 = vmul.f32 %v479, 0.6931472
    %v481 = vmul.f32 -0.5, %v426
    %v482 = vadd.f32 %v481, 1.0
    %v483 = vmul.f32 %v482, %v426
    %v484 = vand.u32 2147483647, %v426
    %vm485 = vcmp.lt.f32.partialorder %v484, 0.0004427343
    %v486 = vsel %vm485, %v483, %v480
    %v487 = vadd.f32 %v428, 1.0
    %v488 = vlog2.pop %v487
    %v489 = vmul.f32 %v488, 0.6931472
    %v490 = vmul.f32 -0.5, %v428
    %v491 = vadd.f32 %v490, 1.0
    %v492 = vmul.f32 %v491, %v428
    %v493 = vand.u32 2147483647, %v428
    %vm494 = vcmp.lt.f32.partialorder %v493, 0.0004427343
    %v495 = vsel %vm494, %v492, %v489
    %v496 = vadd.f32 %v430, 1.0
    %v497 = vlog2.pop %v496
    %v498 = vmul.f32 %v497, 0.6931472
    %v499 = vmul.f32 -0.5, %v430
    %v500 = vadd.f32 %v499, 1.0
    %v501 = vmul.f32 %v500, %v430
    %v502 = vand.u32 2147483647, %v430
    %vm503 = vcmp.lt.f32.partialorder %v502, 0.0004427343
    %v504 = vsel %vm503, %v501, %v498
    %v505 = vadd.f32 %v432, 1.0
    %v506 = vlog2.pop %v505
    %v507 = vmul.f32 %v506, 0.6931472
    %v508 = vmul.f32 -0.5, %v432
    %v509 = vadd.f32 %v508, 1.0
    %v510 = vmul.f32 %v509, %v432
    %v511 = vand.u32 2147483647, %v432
    %vm512 = vcmp.lt.f32.partialorder %v511, 0.0004427343
    %v513 = vsel %vm512, %v510, %v507
    %v514 = vadd.f32 %v434, 1.0
    %v515 = vlog2.pop %v514
    %v516 = vmul.f32 %v515, 0.6931472
    %v517 = vmul.f32 -0.5, %v434
    %v518 = vadd.f32 %v517, 1.0
    %v519 = vmul.f32 %v518, %v434
    %v520 = vand.u32 2147483647, %v434
    %vm521 = vcmp.lt.f32.partialorder %v520, 0.0004427343
    %v522 = vsel %vm521, %v519, %v516
    %v523 = vadd.f32 %v436, 1.0
    %v524 = vlog2.pop %v523
    %v525 = vmul.f32 %v524, 0.6931472
    %v526 = vmul.f32 -0.5, %v436
    %v527 = vadd.f32 %v526, 1.0
    %v528 = vmul.f32 %v527, %v436
    %v529 = vand.u32 2147483647, %v436
    %vm530 = vcmp.lt.f32.partialorder %v529, 0.0004427343
    %v531 = vsel %vm530, %v528, %v525
    %v532 = vadd.f32 %v438, 1.0
    %v533 = vlog2.pop %v532
    %v534 = vmul.f32 %v533, 0.6931472
    %v535 = vmul.f32 -0.5, %v438
    %v536 = vadd.f32 %v535, 1.0
    %v537 = vmul.f32 %v536, %v438
    %v538 = vand.u32 2147483647, %v438
    %vm539 = vcmp.lt.f32.partialorder %v538, 0.0004427343
    %v540 = vsel %vm539, %v537, %v534
    %v541 = vadd.f32 %v440, 1.0
    %v542 = vlog2.pop %v541
    %v543 = vmul.f32 %v542, 0.6931472
    %v544 = vmul.f32 -0.5, %v440
    %v545 = vadd.f32 %v544, 1.0
    %v546 = vmul.f32 %v545, %v440
    %v547 = vand.u32 2147483647, %v440
    %vm548 = vcmp.lt.f32.partialorder %v547, 0.0004427343
    %v549 = vsel %vm548, %v546, %v543
    %v550 = vadd.f32 %v442, 1.0
    %v551 = vlog2.pop %v550
    %v552 = vmul.f32 %v551, 0.6931472
    %v553 = vmul.f32 -0.5, %v442
    %v554 = vadd.f32 %v553, 1.0
    %v555 = vmul.f32 %v554, %v442
    %v556 = vand.u32 2147483647, %v442
    %vm557 = vcmp.lt.f32.partialorder %v556, 0.0004427343
    %v558 = vsel %vm557, %v555, %v552
    %v559 = vadd.f32 %v444, 1.0
    %v560 = vlog2.pop %v559
    %v561 = vmul.f32 %v560, 0.6931472
    %v562 = vmul.f32 -0.5, %v444
    %v563 = vadd.f32 %v562, 1.0
    %v564 = vmul.f32 %v563, %v444
    %v565 = vand.u32 2147483647, %v444
    %vm566 = vcmp.lt.f32.partialorder %v565, 0.0004427343
    %v567 = vsel %vm566, %v564, %v561
    %v568 = vadd.f32 %v446, 1.0
    %v569 = vlog2.pop %v568
    %v570 = vmul.f32 %v569, 0.6931472
    %v571 = vmul.f32 -0.5, %v446
    %v572 = vadd.f32 %v571, 1.0
    %v573 = vmul.f32 %v572, %v446
    %v574 = vand.u32 2147483647, %v446
    %vm575 = vcmp.lt.f32.partialorder %v574, 0.0004427343
    %v576 = vsel %vm575, %v573, %v570
    %v577 = vadd.f32 %v448, 1.0
    %v578 = vlog2.pop %v577
    %v579 = vmul.f32 %v578, 0.6931472
    %v580 = vmul.f32 -0.5, %v448
    %v581 = vadd.f32 %v580, 1.0
    %v582 = vmul.f32 %v581, %v448
    %v583 = vand.u32 2147483647, %v448
    %vm584 = vcmp.lt.f32.partialorder %v583, 0.0004427343
    %v585 = vsel %vm584, %v582, %v579
    %v586 = vadd.f32 %v450, 1.0
    %v587 = vlog2.pop %v586
    %v588 = vmul.f32 %v587, 0.6931472
    %v589 = vmul.f32 -0.5, %v450
    %v590 = vadd.f32 %v589, 1.0
    %v591 = vmul.f32 %v590, %v450
    %v592 = vand.u32 2147483647, %v450
    %vm593 = vcmp.lt.f32.partialorder %v592, 0.0004427343
    %v594 = vsel %vm593, %v591, %v588
    %v595 = vmax.f32 %v371, 0.0
    %v596 = vmax.f32 %v372, 0.0
    %v597 = vmax.f32 %v373, 0.0
    %v598 = vmax.f32 %v374, 0.0
    %v599 = vmax.f32 %v375, 0.0
    %v600 = vmax.f32 %v376, 0.0
    %v601 = vmax.f32 %v377, 0.0
    %v602 = vmax.f32 %v378, 0.0
    %v603 = vmax.f32 %v379, 0.0
    %v604 = vmax.f32 %v380, 0.0
    %v605 = vmax.f32 %v381, 0.0
    %v606 = vmax.f32 %v382, 0.0
    %v607 = vmax.f32 %v383, 0.0
    %v608 = vmax.f32 %v384, 0.0
    %v609 = vmax.f32 %v385, 0.0
    %v610 = vmax.f32 %v386, 0.0
    %v611 = vadd.f32 %v595, %v459
    %v612 = vadd.f32 %v596, %v468
    %v613 = vadd.f32 %v597, %v477
    %v614 = vadd.f32 %v598, %v486
    %v615 = vadd.f32 %v599, %v495
    %v616 = vadd.f32 %v600, %v504
    %v617 = vadd.f32 %v601, %v513
    %v618 = vadd.f32 %v602, %v522
    %v619 = vadd.f32 %v603, %v531
    %v620 = vadd.f32 %v604, %v540
    %v621 = vadd.f32 %v605, %v549
    %v622 = vadd.f32 %v606, %v558
    %v623 = vadd.f32 %v607, %v567
    %v624 = vadd.f32 %v608, %v576
    %v625 = vadd.f32 %v609, %v585
    %v626 = vadd.f32 %v610, %v594
    %vm627 = vcmp.ne.f32.partialorder %v323, 0.0
    %vm628 = vcmp.ne.f32.partialorder %v324, 0.0
    %vm629 = vcmp.ne.f32.partialorder %v325, 0.0
    %vm630 = vcmp.ne.f32.partialorder %v326, 0.0
    %vm631 = vcmp.ne.f32.partialorder %v327, 0.0
    %vm632 = vcmp.ne.f32.partialorder %v328, 0.0
    %vm633 = vcmp.ne.f32.partialorder %v329, 0.0
    %vm634 = vcmp.ne.f32.partialorder %v330, 0.0
    %vm635 = vcmp.ne.f32.partialorder %v331, 0.0
    %vm636 = vcmp.ne.f32.partialorder %v332, 0.0
    %vm637 = vcmp.ne.f32.partialorder %v333, 0.0
    %vm638 = vcmp.ne.f32.partialorder %v334, 0.0
    %vm639 = vcmp.ne.f32.partialorder %v335, 0.0
    %vm640 = vcmp.ne.f32.partialorder %v336, 0.0
    %vm641 = vcmp.ne.f32.partialorder %v337, 0.0
    %vm642 = vcmp.ne.f32.partialorder %v338, 0.0
    %p643 = scmp.eq.s32.totalorder %s100, %s99
    // Predicated region
    $region18: #{tpu_custom_call.1} parent=1 // pred_check
      %p644 = pneg %p643
    $region19: #{tpu_custom_call.1} parent=1 // pred_check_branch
      %646 = sbr.rel (%p644) target = $region21
    $region20: #{tpu_custom_call.1} parent=1 // pred_region
      %v647 = vlaneseq
      %v648 = vshrl.u32 %v647, 7
      %v649 = vadd.s32 %v648, 8
      %v650 = vadd.s32 %v648, 16
      %v651 = vadd.s32 %v648, 24
      %v652 = vadd.s32 %v648, 32
      %v653 = vadd.s32 %v648, 40
      %v654 = vadd.s32 %v648, 48
      %v655 = vadd.s32 %v648, 56
      %v656 = vadd.s32 %v648, 64
      %v657 = vadd.s32 %v648, 72
      %v658 = vadd.s32 %v648, 80
      %v659 = vadd.s32 %v648, 88
      %v660 = vadd.s32 %v648, 96
      %v661 = vadd.s32 %v648, 104
      %v662 = vadd.s32 %v648, 112
      %v663 = vadd.s32 %v648, 120
      %v664 = vlaneseq
      %v665 = vand.u32 %v664, 127
      %vm666 = vcmp.gt.s32.totalorder %v665, %v648
      %vm667 = vcmp.gt.s32.totalorder %v665, %v649
      %vm668 = vcmp.gt.s32.totalorder %v665, %v650
      %vm669 = vcmp.gt.s32.totalorder %v665, %v651
      %vm670 = vcmp.gt.s32.totalorder %v665, %v652
      %vm671 = vcmp.gt.s32.totalorder %v665, %v653
      %vm672 = vcmp.gt.s32.totalorder %v665, %v654
      %vm673 = vcmp.gt.s32.totalorder %v665, %v655
      %vm674 = vcmp.gt.s32.totalorder %v665, %v656
      %vm675 = vcmp.gt.s32.totalorder %v665, %v657
      %vm676 = vcmp.gt.s32.totalorder %v665, %v658
      %vm677 = vcmp.gt.s32.totalorder %v665, %v659
      %vm678 = vcmp.gt.s32.totalorder %v665, %v660
      %vm679 = vcmp.gt.s32.totalorder %v665, %v661
      %vm680 = vcmp.gt.s32.totalorder %v665, %v662
      %vm681 = vcmp.gt.s32.totalorder %v665, %v663
      %vm682 = vmand %vm666, %vm627
      %vm683 = vmand %vm667, %vm628
      %vm684 = vmand %vm668, %vm629
      %vm685 = vmand %vm669, %vm630
      %vm686 = vmand %vm670, %vm631
      %vm687 = vmand %vm671, %vm632
      %vm688 = vmand %vm672, %vm633
      %vm689 = vmand %vm673, %vm634
      %vm690 = vmand %vm674, %vm635
      %vm691 = vmand %vm675, %vm636
      %vm692 = vmand %vm676, %vm637
      %vm693 = vmand %vm677, %vm638
      %vm694 = vmand %vm678, %vm639
      %vm695 = vmand %vm679, %vm640
      %vm696 = vmand %vm680, %vm641
      %vm697 = vmand %vm681, %vm642
      %s698 = smul.u32 %s100, 128
      %s699 = ssub.s32 8, %s698
      %v700 = vstv %s699
      %vm701 = vcmp.lt.s32.totalorder %v665, %v700
      %vm702 = vmand %vm682, %vm701
      %vm703 = vmand %vm683, %vm701
      %vm704 = vmand %vm684, %vm701
      %vm705 = vmand %vm685, %vm701
      %vm706 = vmand %vm686, %vm701
      %vm707 = vmand %vm687, %vm701
      %vm708 = vmand %vm688, %vm701
      %vm709 = vmand %vm689, %vm701
      %vm710 = vmand %vm690, %vm701
      %vm711 = vmand %vm691, %vm701
      %vm712 = vmand %vm692, %vm701
      %vm713 = vmand %vm693, %vm701
      %vm714 = vmand %vm694, %vm701
      %vm715 = vmand %vm695, %vm701
      %vm716 = vmand %vm696, %vm701
      %vm717 = vmand %vm697, %vm701
      %v718 = vsel %vm702, %v611, 0.0
      %v719 = vsel %vm703, %v612, 0.0
      %v720 = vsel %vm704, %v613, 0.0
      %v721 = vsel %vm705, %v614, 0.0
      %v722 = vsel %vm706, %v615, 0.0
      %v723 = vsel %vm707, %v616, 0.0
      %v724 = vsel %vm708, %v617, 0.0
      %v725 = vsel %vm709, %v618, 0.0
      %v726 = vsel %vm710, %v619, 0.0
      %v727 = vsel %vm711, %v620, 0.0
      %v728 = vsel %vm712, %v621, 0.0
      %v729 = vsel %vm713, %v622, 0.0
      %v730 = vsel %vm714, %v623, 0.0
      %v731 = vsel %vm715, %v624, 0.0
      %v732 = vsel %vm716, %v625, 0.0
      %v733 = vsel %vm717, %v626, 0.0
      %v734 = vadd.f32 %v718, %v719
      %v735 = vadd.f32 %v734, %v720
      %v736 = vadd.f32 %v735, %v721
      %v737 = vadd.f32 %v736, %v722
      %v738 = vadd.f32 %v737, %v723
      %v739 = vadd.f32 %v738, %v724
      %v740 = vadd.f32 %v739, %v725
      %v741 = vadd.f32 %v740, %v726
      %v742 = vadd.f32 %v741, %v727
      %v743 = vadd.f32 %v742, %v728
      %v744 = vadd.f32 %v743, %v729
      %v745 = vadd.f32 %v744, %v730
      %v746 = vadd.f32 %v745, %v731
      %v747 = vadd.f32 %v746, %v732
      %v748 = vadd.f32 %v747, %v733
      %v749 = vsel %vm702, 1, 0
      %v750 = vsel %vm703, 1, 0
      %v751 = vsel %vm704, 1, 0
      %v752 = vsel %vm705, 1, 0
      %v753 = vsel %vm706, 1, 0
      %v754 = vsel %vm707, 1, 0
      %v755 = vsel %vm708, 1, 0
      %v756 = vsel %vm709, 1, 0
      %v757 = vsel %vm710, 1, 0
      %v758 = vsel %vm711, 1, 0
      %v759 = vsel %vm712, 1, 0
      %v760 = vsel %vm713, 1, 0
      %v761 = vsel %vm714, 1, 0
      %v762 = vsel %vm715, 1, 0
      %v763 = vsel %vm716, 1, 0
      %v764 = vsel %vm717, 1, 0
      %v765 = vadd.s32 %v749, %v753
      %v766 = vadd.s32 %v750, %v754
      %v767 = vadd.s32 %v751, %v755
      %v768 = vadd.s32 %v752, %v756
      %v769 = vadd.s32 %v765, %v757
      %v770 = vadd.s32 %v766, %v758
      %v771 = vadd.s32 %v767, %v759
      %v772 = vadd.s32 %v768, %v760
      %v773 = vadd.s32 %v769, %v761
      %v774 = vadd.s32 %v770, %v762
      %v775 = vadd.s32 %v771, %v763
      %v776 = vadd.s32 %v772, %v764
      %v777 = vadd.s32 %v773, %v774
      %v778 = vadd.s32 %v775, %v776
      %v779 = vadd.s32 %v777, %v778
      %780 = vst [vmem:[#allocation2] sm:$0xff] %v748
      %781 = vst [vmem:[#allocation3] sm:$0xff] %v779
    $region21: #{tpu_custom_call.1} parent=1 // pred_fallthru
      _
    %p782 = scmp.gt.s32.totalorder %s100, %s99
    %p783 = scmp.lt.s32.totalorder %s100, 0
    %p784 = pnand %p782, %p783
    %p785 = pneg %p784
    // Predicated region
    $region22: #{tpu_custom_call.1} parent=1 // pred_check
      _
    $region23: #{tpu_custom_call.1} parent=1 // pred_check_branch
      %787 = sbr.rel (%p784) target = $region25
    $region24: #{tpu_custom_call.1} parent=1 // pred_region
      %v788 = vsel %vm627, %v611, 0.0
      %v789 = vsel %vm628, %v612, 0.0
      %v790 = vsel %vm629, %v613, 0.0
      %v791 = vsel %vm630, %v614, 0.0
      %v792 = vsel %vm631, %v615, 0.0
      %v793 = vsel %vm632, %v616, 0.0
      %v794 = vsel %vm633, %v617, 0.0
      %v795 = vsel %vm634, %v618, 0.0
      %v796 = vsel %vm635, %v619, 0.0
      %v797 = vsel %vm636, %v620, 0.0
      %v798 = vsel %vm637, %v621, 0.0
      %v799 = vsel %vm638, %v622, 0.0
      %v800 = vsel %vm639, %v623, 0.0
      %v801 = vsel %vm640, %v624, 0.0
      %v802 = vsel %vm641, %v625, 0.0
      %v803 = vsel %vm642, %v626, 0.0
      %v804 = vadd.f32 %v788, %v789
      %v805 = vadd.f32 %v804, %v790
      %v806 = vadd.f32 %v805, %v791
      %v807 = vadd.f32 %v806, %v792
      %v808 = vadd.f32 %v807, %v793
      %v809 = vadd.f32 %v808, %v794
      %v810 = vadd.f32 %v809, %v795
      %v811 = vadd.f32 %v810, %v796
      %v812 = vadd.f32 %v811, %v797
      %v813 = vadd.f32 %v812, %v798
      %v814 = vadd.f32 %v813, %v799
      %v815 = vadd.f32 %v814, %v800
      %v816 = vadd.f32 %v815, %v801
      %v817 = vadd.f32 %v816, %v802
      %v818 = vadd.f32 %v817, %v803
      %v819 = vsel %vm627, 1, 0
      %v820 = vsel %vm628, 1, 0
      %v821 = vsel %vm629, 1, 0
      %v822 = vsel %vm630, 1, 0
      %v823 = vsel %vm631, 1, 0
      %v824 = vsel %vm632, 1, 0
      %v825 = vsel %vm633, 1, 0
      %v826 = vsel %vm634, 1, 0
      %v827 = vsel %vm635, 1, 0
      %v828 = vsel %vm636, 1, 0
      %v829 = vsel %vm637, 1, 0
      %v830 = vsel %vm638, 1, 0
      %v831 = vsel %vm639, 1, 0
      %v832 = vsel %vm640, 1, 0
      %v833 = vsel %vm641, 1, 0
      %v834 = vsel %vm642, 1, 0
      %v835 = vadd.s32 %v819, %v823
      %v836 = vadd.s32 %v820, %v824
      %v837 = vadd.s32 %v821, %v825
      %v838 = vadd.s32 %v822, %v826
      %v839 = vadd.s32 %v835, %v827
      %v840 = vadd.s32 %v836, %v828
      %v841 = vadd.s32 %v837, %v829
      %v842 = vadd.s32 %v838, %v830
      %v843 = vadd.s32 %v839, %v831
      %v844 = vadd.s32 %v840, %v832
      %v845 = vadd.s32 %v841, %v833
      %v846 = vadd.s32 %v842, %v834
      %v847 = vadd.s32 %v843, %v844
      %v848 = vadd.s32 %v845, %v846
      %v849 = vadd.s32 %v847, %v848
      %v850 = vld [vmem:[#allocation2] sm:$0xff]
      %v851 = vadd.f32 %v850, %v818
      %852 = vst [vmem:[#allocation2] sm:$0xff] %v851
      %v853 = vld [vmem:[#allocation3] sm:$0xff]
      %v854 = vadd.s32 %v853, %v849
      %855 = vst [vmem:[#allocation3] sm:$0xff] %v854
    $region25: #{tpu_custom_call.1} parent=1 // pred_fallthru
      _
    %p856 = scmp.eq.s32.totalorder %s100, 0
    %p857 = pnand %p782, %p856
    %p858 = pneg %p857
    // Predicated region
    $region26: #{tpu_custom_call.1} parent=1 // pred_check
      _
    $region27: #{tpu_custom_call.1} parent=1 // pred_check_branch
      %860 = sbr.rel (%p857) target = $region29
    $region28: #{tpu_custom_call.1} parent=1 // pred_region
      %v861 = vlaneseq
      %v862 = vand.u32 %v861, 127
      %s863 = smul.u32 %s100, 128
      %s864 = ssub.s32 8, %s863
      %v865 = vstv %s864
      %vm866 = vcmp.lt.s32.totalorder %v862, %v865
      %vm867 = vmand %vm866, %vm627
      %vm868 = vmand %vm866, %vm628
      %vm869 = vmand %vm866, %vm629
      %vm870 = vmand %vm866, %vm630
      %vm871 = vmand %vm866, %vm631
      %vm872 = vmand %vm866, %vm632
      %vm873 = vmand %vm866, %vm633
      %vm874 = vmand %vm866, %vm634
      %vm875 = vmand %vm866, %vm635
      %vm876 = vmand %vm866, %vm636
      %vm877 = vmand %vm866, %vm637
      %vm878 = vmand %vm866, %vm638
      %vm879 = vmand %vm866, %vm639
      %vm880 = vmand %vm866, %vm640
      %vm881 = vmand %vm866, %vm641
      %vm882 = vmand %vm866, %vm642
      %v883 = vsel %vm867, %v611, 0.0
      %v884 = vsel %vm868, %v612, 0.0
      %v885 = vsel %vm869, %v613, 0.0
      %v886 = vsel %vm870, %v614, 0.0
      %v887 = vsel %vm871, %v615, 0.0
      %v888 = vsel %vm872, %v616, 0.0
      %v889 = vsel %vm873, %v617, 0.0
      %v890 = vsel %vm874, %v618, 0.0
      %v891 = vsel %vm875, %v619, 0.0
      %v892 = vsel %vm876, %v620, 0.0
      %v893 = vsel %vm877, %v621, 0.0
      %v894 = vsel %vm878, %v622, 0.0
      %v895 = vsel %vm879, %v623, 0.0
      %v896 = vsel %vm880, %v624, 0.0
      %v897 = vsel %vm881, %v625, 0.0
      %v898 = vsel %vm882, %v626, 0.0
      %v899 = vadd.f32 %v883, %v884
      %v900 = vadd.f32 %v899, %v885
      %v901 = vadd.f32 %v900, %v886
      %v902 = vadd.f32 %v901, %v887
      %v903 = vadd.f32 %v902, %v888
      %v904 = vadd.f32 %v903, %v889
      %v905 = vadd.f32 %v904, %v890
      %v906 = vadd.f32 %v905, %v891
      %v907 = vadd.f32 %v906, %v892
      %v908 = vadd.f32 %v907, %v893
      %v909 = vadd.f32 %v908, %v894
      %v910 = vadd.f32 %v909, %v895
      %v911 = vadd.f32 %v910, %v896
      %v912 = vadd.f32 %v911, %v897
      %v913 = vadd.f32 %v912, %v898
      %v914 = vsel %vm867, 1, 0
      %v915 = vsel %vm868, 1, 0
      %v916 = vsel %vm869, 1, 0
      %v917 = vsel %vm870, 1, 0
      %v918 = vsel %vm871, 1, 0
      %v919 = vsel %vm872, 1, 0
      %v920 = vsel %vm873, 1, 0
      %v921 = vsel %vm874, 1, 0
      %v922 = vsel %vm875, 1, 0
      %v923 = vsel %vm876, 1, 0
      %v924 = vsel %vm877, 1, 0
      %v925 = vsel %vm878, 1, 0
      %v926 = vsel %vm879, 1, 0
      %v927 = vsel %vm880, 1, 0
      %v928 = vsel %vm881, 1, 0
      %v929 = vsel %vm882, 1, 0
      %v930 = vadd.s32 %v914, %v918
      %v931 = vadd.s32 %v915, %v919
      %v932 = vadd.s32 %v916, %v920
      %v933 = vadd.s32 %v917, %v921
      %v934 = vadd.s32 %v930, %v922
      %v935 = vadd.s32 %v931, %v923
      %v936 = vadd.s32 %v932, %v924
      %v937 = vadd.s32 %v933, %v925
      %v938 = vadd.s32 %v934, %v926
      %v939 = vadd.s32 %v935, %v927
      %v940 = vadd.s32 %v936, %v928
      %v941 = vadd.s32 %v937, %v929
      %v942 = vadd.s32 %v938, %v939
      %v943 = vadd.s32 %v940, %v941
      %v944 = vadd.s32 %v942, %v943
      %v945 = vld [vmem:[#allocation2] sm:$0xff]
      %v946 = vadd.f32 %v945, %v913
      %947 = vst [vmem:[#allocation2] sm:$0xff] %v946
      %v948 = vld [vmem:[#allocation3] sm:$0xff]
      %v949 = vadd.s32 %v948, %v944
      %950 = vst [vmem:[#allocation3] sm:$0xff] %v949
    $region29: #{tpu_custom_call.1} parent=1 // pred_fallthru
      _
    // Predicated region
    $region30: #{tpu_custom_call.1} parent=1 // pred_check
      %p951 = pneg %p856
    $region31: #{tpu_custom_call.1} parent=1 // pred_check_branch
      %953 = sbr.rel (%p951) target = $region33
    $region32: #{tpu_custom_call.1} parent=1 // pred_region
      %v954 = vld [vmem:[#allocation2] sm:$0xff]
      %955 = vadd.xlane.f32.xlu0 %v954
      %v956 = vpop.xlane.xlu0 %955
      %v957 = vrot.slane %v956, 4
      %v958 = vadd.f32 %v956, %v957
      %v959 = vrot.slane %v958, 2
      %v960 = vadd.f32 %v958, %v959
      %v961 = vrot.slane %v960, 1
      %v962 = vadd.f32 %v960, %v961
      %s963 = vtos %v962
      %v964 = vstv %s963
      %965 = vst [vmem:[#allocation7] sm:$0xff] %v964
      %v966 = vld [vmem:[#allocation3] sm:$0xff]
      %v967 = vand.u32 %v966, 65535
      %v968 = vshrl.u32 %v966, 16
      %v969 = vcvt.s32.f32 %v967
      %v970 = vcvt.s32.f32 %v968
      %971 = vadd.xlane.f32.xlu0 %v969
      %v972 = vpop.xlane.xlu0 %971
      %973 = vadd.xlane.f32.xlu0 %v970
      %v974 = vpop.xlane.xlu0 %973
      %v975 = vcvt.f32.s32 %v972
      %v976 = vcvt.f32.s32 %v974
      %v977 = vshll.u32 %v976, 16
      %v978 = vadd.s32 %v977, %v975
      %v979 = vrot.slane %v978, 4
      %v980 = vadd.s32 %v978, %v979
      %v981 = vrot.slane %v980, 2
      %v982 = vadd.s32 %v980, %v981
      %v983 = vrot.slane %v982, 1
      %v984 = vadd.s32 %v982, %v983
      %s985 = vtos %v984
      %v986 = vstv %s985
      %987 = vst [vmem:[#allocation9] sm:$0xff] %v986
    $region33: #{tpu_custom_call.1} parent=1 // pred_fallthru
      _
    // Predicated region
    $region34: #{tpu_custom_call.1} parent=1 // pred_check
      _
    $region35: #{tpu_custom_call.1} parent=1 // pred_check_branch
      %989 = sbr.rel (0) target = $region37
    $region36: #{tpu_custom_call.1} parent=1 // pred_region
      %s990 = sld [smem:[#allocation5]]
      %s992 = ssub.s32 128, 128
      %993 = vsyncadd [#allocation8], %s992
      %s994 = smul.addr %s990, 128
      %s995 = scalar_lea.hbm %s6, %s994
      %s997 = sshll.u32 [#allocation7], 4
      %s998 = int_to_ptr.vmem [resolvable:$true] %s997
      %1000 = dma.vmem_to_hbm [thread:$0]  %s998, 128, %s995, [#allocation8]
    $region37: #{tpu_custom_call.1} parent=1 // pred_fallthru
      _
    // Predicated region
    $region38: #{tpu_custom_call.1} parent=1 // pred_check
      _
    $region39: #{tpu_custom_call.1} parent=1 // pred_check_branch
      %1002 = sbr.rel (0) target = $region41
    $region40: #{tpu_custom_call.1} parent=1 // pred_region
      %s1003 = sld [smem:[#allocation5]]
      %s1005 = ssub.s32 128, 128
      %1006 = vsyncadd [#allocation10], %s1005
      %s1007 = smul.addr %s1003, 128
      %s1008 = scalar_lea.hbm %s7, %s1007
      %s1010 = sshll.u32 [#allocation9], 4
      %s1011 = int_to_ptr.vmem [resolvable:$true] %s1010
      %1013 = dma.vmem_to_hbm [thread:$0]  %s1011, 128, %s1008, [#allocation10]
    $region41: #{tpu_custom_call.1} parent=1 // pred_fallthru
      _
    // Predicated region
    $region42: #{tpu_custom_call.1} parent=1 // pred_check
      _
    $region43: #{tpu_custom_call.1} parent=1 // pred_check_branch
      %1015 = sbr.rel (0) target = $region45
    $region44: #{tpu_custom_call.1} parent=1 // pred_region
      %1016 = dma.done [#allocation8], 128
    $region45: #{tpu_custom_call.1} parent=1 // pred_fallthru
      _
    // Predicated region
    $region46: #{tpu_custom_call.1} parent=1 // pred_check
      _
    $region47: #{tpu_custom_call.1} parent=1 // pred_check_branch
      %1018 = sbr.rel (0) target = $region49
    $region48: #{tpu_custom_call.1} parent=1 // pred_region
      %1019 = dma.done [#allocation10], 128
    $region49: #{tpu_custom_call.1} parent=1 // pred_fallthru
      _
    %1020 = vsyncpa [#allocation8], 1
    %1021 = vsyncpa [#allocation10], 1

</llo_original>
